<compile_context>
chip_gen: v6e
topology: v6e:2x2x1
jax: 0.10.0
libtpu: 0.0.40
codegen_flags: <defaults>
</compile_context>

<pallas_src>
import math

import jax
import jax.numpy as jnp
from jax import lax
from jax.experimental import pallas as pl
from jax.experimental.pallas import tpu as pltpu

_MIB = 1024 * 1024
_PIPELINE_MODE_OK = True  # flipped off if this jax build rejects BlockSpec(pipeline_mode=...)


def _round_up(x: int, m: int) -> int:
    return ((x + m - 1) // m) * m


def _vmem_capacity_bytes() -> int:
    try:
        return int(pltpu.get_tpu_info().vmem_capacity_bytes)
    except Exception:
        return 64 * _MIB  # conservative default (v7x per-TensorCore)


def _make_kernel(remove_diag: bool, add_bn: bool, row_idx, eps: float = 1e-5):
    def kernel(net_ref, gate_ref, w_ref, side_ref, out_ref):
        # gates = gate_in_tile @ W_tile^T, contracting the In axis of both operands.
        # W stays in the PyTorch (Out, In) layout (no wrapper-side transpose = no
        # extra HBM pass over the weight); native-dtype operands, f32 MXU accumulation.
        # TODO(synk): verify via pl.lower_as_mlir that contracting the RHS lane axis
        # does not emit a per-tile XLU transpose; if it does, pre-transposing W to
        # (In, Out) is preferable for large-N compute-bound deployments.
        gates = lax.dot_general(
            gate_ref[...], w_ref[...],
            dimension_numbers=(((1,), (1,)), ((), ())),
            preferred_element_type=jnp.float32,
        )  # (tm, tn) f32

        def side(name):
            r = row_idx[name]
            return side_ref[r:r + 1, :]  # (1, tn) f32 row of the packed side operand

        if not add_bn:
            gates = gates + side("bias")
        if remove_diag:
            # This term must be in f32 against the f32 gates.
            gates = gates - net_ref[...].astype(jnp.float32) * side("diag")
        if add_bn:
            # Exact biased batch statistics: the batch axis is never tiled/padded
            # when add_bn is set, so this tile sees the full batch. Two-pass
            # (mean-centered) variance avoids E[x^2]-E[x]^2 cancellation.
            inv_n = 1.0 / gates.shape[0]
            mean = jnp.sum(gates, axis=0, keepdims=True) * inv_n
            centered = gates - mean
            var = jnp.sum(centered * centered, axis=0, keepdims=True) * inv_n
            gates = side("gamma") * centered * lax.rsqrt(var + eps) + side("beta")

        # Final gating multiply in the input dtype (avoids a blanket f32 upcast of
        # the (tm, tn) net tile on v6e/v7x; on f32 inputs this is identical).
        out_ref[...] = net_ref[...] * jax.nn.sigmoid(gates).astype(out_ref.dtype)

    return kernel


def _vmem_need_bytes(tm, tn, in_size, n_side, itemsize, w_bufs, sub):
    f32 = 4
    tm_p = _round_up(tm, sub)
    tn_p = _round_up(tn, 128)
    in_p = _round_up(in_size, 128)
    return (2 * tm_p * in_p * itemsize            # gate_in tile (counted double-buffered
                                                  #   even if Buffered(1) is honoured)
            + w_bufs * tn_p * in_p * itemsize     # weight tile stream
            + 2 * tm_p * tn_p * itemsize          # net_in tile
            + 2 * tm_p * tn_p * itemsize          # output tile
            + 2 * _round_up(n_side, 8) * tn_p * f32  # packed bias/diag/gamma/beta
            + 6 * tm_p * tn_p * f32)              # f32 epilogue intermediates + headroom


def _pick_tiles(n, out_size, in_size, itemsize, n_side, budget, add_bn, sub,
                want_weight_bufs):
    """Pick (tn, tm, w_bufs): feature tile, batch tile, weight buffer depth."""
    # Feature-tile candidates (largest first). Enforce >=4 tiles when out_size allows
    # it (keeps the weight DMA hidden under compute and gives v7x >=2 grid steps to
    # shard across its two TensorCores); every candidate >=256 is a multiple of the
    # v6e/v7x MXU output width (128-multiples are fine on v5e's 4x128 MXU).
    if out_size % 128 != 0:
        tn_cands = [out_size]                     # (8,128) rule: full extent only
    else:
        n128 = out_size // 128
        min_tiles = 4 if n128 >= 4 else (2 if n128 >= 2 else 1)
        tn_cands = [c for c in (2048, 1536, 1024, 768, 512, 384, 256, 128)
                    if out_size % c == 0 and out_size // c >= min_tiles]
        if not tn_cands:
            tn_cands = [128]

    # Batch-tile candidates. BN needs the full batch resident for exact statistics.
    if add_bn:
        tm_cands = [n]
    else:
        full = _round_up(n, sub)
        tm_cands = [full] + [c for c in (1024, 512, 256, 128, 64, 32, 16, 8)
                             if c % sub == 0 and c < full]

    bufs_options = [want_weight_bufs, 2] if want_weight_bufs > 2 else [2]
    for w_bufs in bufs_options:
        for tn in tn_cands:
            for tm in tm_cands:
                if _vmem_need_bytes(tm, tn, in_size, n_side, itemsize,
                                    w_bufs, sub) <= budget:
                    return tn, tm, w_bufs
    # TODO(synk): nothing fits the budget (huge In / huge N with add_BN) -> needs a
    # K-axis reduction grid with an f32 accumulator; degrade to the smallest tiles.
    return tn_cands[-1], tm_cands[-1], 2


def context_gating(net_in, gate_in, weight, bias=None, gamma=None, beta=None,
                   *, remove_diag: bool, add_bn: bool):
    """net_in: (N, Out), gate_in: (N, In), weight: (Out, In) [PyTorch layout]."""
    global _PIPELINE_MODE_OK

    n, out_size = net_in.shape
    n2, in_size = gate_in.shape
    assert n2 == n
    assert weight.shape == (out_size, in_size)
    if remove_diag:
        assert out_size == in_size, "remove_diag requires a square weight"
    # NOTE: the original module builds BatchNorm1d(input_size) but applies it to
    # output_size features, so add_BN only makes sense when input_size == output_size.

    dtype = net_in.dtype
    itemsize = jnp.dtype(dtype).itemsize
    sub = max(8, 32 // itemsize)          # sublane multiple: 8 f32 / 16 bf16 / 32 int8

    # --- generation-aware VMEM policy ------------------------------------------
    cap = _vmem_capacity_bytes()          # 128 MiB v5e/v6e, 64 MiB v7x (per TC)
    budget = int(cap * 0.70)              # what the tile picker may plan for
    vmem_limit = max(32 * _MIB, min(int(cap * 0.85), cap - 4 * _MIB))
    want_weight_bufs = 3 if cap >= 96 * _MIB else 2   # deeper weight pipeline on v5e/v6e

    # --- pack the tiny per-feature vectors into one small operand ---------------
    rows, row_idx = [], {}

    def _add_row(name, vec):
        row_idx[name] = len(rows)
        rows.append(jnp.asarray(vec, jnp.float32).reshape(1, out_size))

    if not add_bn:
        _add_row("bias", bias)
    if remove_diag:
        _add_row("diag", jnp.diag(weight))
    if add_bn:
        _add_row("gamma", gamma)
        _add_row("beta", beta)
    side = jnp.concatenate(rows, axis=0)   # (n_side, Out) f32
    n_side = side.shape[0]

    # --- tiling ------------------------------------------------------------------
    tn, tm, w_bufs = _pick_tiles(n, out_size, in_size, itemsize, n_side, budget,
                                 add_bn, sub, want_weight_bufs)
    assert out_size % tn == 0
    n_feat = out_size // tn

    if add_bn:
        n_pad = n                          # batch stays resident (exact BN stats)
    else:
        n_pad = _round_up(n, tm)           # pad once in HBM -> no masked sublanes
    n_batch = n_pad // tm

    net_p, gate_p = net_in, gate_in
    if n_pad != n:
        net_p = jnp.pad(net_in, ((0, n_pad - n), (0, 0)))
        gate_p = jnp.pad(gate_in, ((0, n_pad - n), (0, 0)))

    kernel = _make_kernel(remove_diag, add_bn, row_idx)
    gate_resident = (n_batch == 1)         # constant index_map -> 1 buffer suffices

    def _run(use_pipeline_mode):
        def spec(shape, imap, bufs=None):
            if use_pipeline_mode and bufs is not None:
                return pl.BlockSpec(shape, imap, pipeline_mode=pl.Buffered(bufs))
            return pl.BlockSpec(shape, imap)

        in_specs = [
            # net_in: (batch tile, feature tile)
            spec((tm, tn), lambda j, i: (i, j)),
            # gate_in: full In extent; single-buffered when the whole (padded)
            # batch is one tile, otherwise streamed over batch tiles.
            spec((tm, in_size), lambda j, i: (i, 0),
                 bufs=1 if gate_resident else None),
            # weight row-tile in (Out, In) layout; index_map is invariant over the
            # inner batch axis -> each weight tile is DMA'd exactly once; deeper
            # buffering on 128-MiB-VMEM chips keeps the HBM weight stream saturated.
            spec((tn, in_size), lambda j, i: (j, 0),
                 bufs=w_bufs if w_bufs != 2 else None),
            # packed bias/diag/gamma/beta: one tiny DMA per feature tile.
            spec((n_side, tn), lambda j, i: (0, j)),
        ]
        out_spec = spec((tm, tn), lambda j, i: (i, j))

        return pl.pallas_call(
            kernel,
            out_shape=jax.ShapeDtypeStruct((n_pad, out_size), dtype),
            grid=(n_feat, n_batch),
            in_specs=in_specs,
            out_specs=out_spec,
            compiler_params=pltpu.CompilerParams(
                # Feature tiles are fully independent (BN reduces over the resident
                # batch only) -> v7x shards them across its two TensorCores; the
                # batch axis stays "arbitrary" so the weight tile is reused across
                # it within a core.
                dimension_semantics=("parallel", "arbitrary"),
                vmem_limit_bytes=vmem_limit,
            ),
        )(net_p, gate_p, weight, side)

    wants_pm = gate_resident or w_bufs != 2
    if _PIPELINE_MODE_OK and wants_pm:
        try:
            out = _run(True)
        except Exception:
            _PIPELINE_MODE_OK = False      # this jax build rejects pipeline_mode
            out = _run(False)
    else:
        out = _run(False)

    return out[:n] if n_pad != n else out


def _reference(net_in, gate_in, weight, bias, gamma, beta, *, remove_diag, add_bn,
               eps=1e-5):
    gates = gate_in @ weight.T
    if not add_bn:
        gates = gates + bias
    if remove_diag:
        gates = gates - net_in * jnp.diag(weight)
    if add_bn:
        mean = jnp.mean(gates, axis=0, keepdims=True)
        var = jnp.mean((gates - mean) ** 2, axis=0, keepdims=True)
        gates = gamma * (gates - mean) / jnp.sqrt(var + eps) + beta
    return net_in * jax.nn.sigmoid(gates)


def _check(name, out, ref, atol, rtol):
    if not bool(jnp.allclose(out, ref, atol=atol, rtol=rtol)):
        err = float(jnp.max(jnp.abs(out - ref)))
        raise AssertionError(f"{name}: max abs err {err:.3e} (atol={atol}, rtol={rtol})")


if __name__ == "__main__":
    key = jax.random.PRNGKey(0)

    # --- case A: module-faithful small shapes (batch=8, input=output=32) -------
    N, IN, OUT = 8, 32, 32
    k_net, k_gate, k_w, k_b, key = jax.random.split(key, 5)
    net_in = jax.random.normal(k_net, (N, OUT), jnp.float32)
    gate_in = jax.random.normal(k_gate, (N, IN), jnp.float32)
    w_std = math.sqrt(2.0 / (IN + OUT))                  # xavier_normal for fc.weight
    weight = jax.random.normal(k_w, (OUT, IN), jnp.float32) * w_std
    # TODO(synk): nn.init.xavier_normal on a 1-D bias is invalid in PyTorch;
    # we substitute a deterministic normal init of the same scale.
    bias = jax.random.normal(k_b, (OUT,), jnp.float32) * w_std
    gamma = jnp.ones((OUT,), jnp.float32)                # BatchNorm1d default affine
    beta = jnp.zeros((OUT,), jnp.float32)

    for remove_diag, add_bn in [(True, True), (True, False), (False, False)]:
        out = context_gating(net_in, gate_in, weight, bias, gamma, beta,
                             remove_diag=remove_diag, add_bn=add_bn)
        out = jax.block_until_ready(out)
        ref = _reference(net_in, gate_in, weight, bias, gamma, beta,
                         remove_diag=remove_diag, add_bn=add_bn)
        _check(f"A remove_diag={remove_diag} add_bn={add_bn}", out, ref, 1e-4, 1e-4)

    # --- case B: exercises feature tiling, batch padding, packed side operand --
    N2, D2 = 20, 256                                     # IN == OUT == 256
    k_net, k_gate, k_w, k_b, k_g, k_be, key = jax.random.split(key, 7)
    net2 = jax.random.normal(k_net, (N2, D2), jnp.float32)
    gate2 = jax.random.normal(k_gate, (N2, D2), jnp.float32)
    w2 = jax.random.normal(k_w, (D2, D2), jnp.float32) * math.sqrt(2.0 / (2 * D2))
    b2 = jax.random.normal(k_b, (D2,), jnp.float32) * 0.1
    g2 = 1.0 + 0.1 * jax.random.normal(k_g, (D2,), jnp.float32)
    be2 = 0.1 * jax.random.normal(k_be, (D2,), jnp.float32)

    for remove_diag, add_bn in [(False, False), (True, True)]:
        out = context_gating(net2, gate2, w2, b2, g2, be2,
                             remove_diag=remove_diag, add_bn=add_bn)
        out = jax.block_until_ready(out)
        ref = _reference(net2, gate2, w2, b2, g2, be2,
                         remove_diag=remove_diag, add_bn=add_bn)
        # looser tolerance: default matmul precision may differ slightly between
        # the Pallas MXU tiles and XLA's reference contraction at K=256
        _check(f"B remove_diag={remove_diag} add_bn={add_bn}", out, ref, 5e-3, 5e-3)

    print("KERNEL_OK")
</pallas_src>

<mosaic_0001>
module attributes {stable_mosaic.version = 11 : i64} {
  func.func @kernel(%arg0: i32, %arg1: i32, %arg2: memref<8x32xf32, #tpu.memory_space<vmem>>, %arg3: memref<8x32xf32, #tpu.memory_space<vmem>>, %arg4: memref<32x32xf32, #tpu.memory_space<vmem>>, %arg5: memref<3x32xf32, #tpu.memory_space<vmem>>, %arg6: memref<8x32xf32, #tpu.memory_space<vmem>>) attributes {dimension_semantics = [#tpu.dimension_semantics<parallel>, #tpu.dimension_semantics<arbitrary>], iteration_bounds = array<i64: 1, 1>, scalar_prefetch = 0 : i64, scratch_operands = 0 : i64, tpu.core_type = #tpu.core_type<tc>, window_params = [{transform_indices = @transform_0, window_bounds = array<i64: 8, 32>}, {pipeline_mode = #tpu.pipeline_mode<synchronous>, transform_indices = @transform_1, window_bounds = array<i64: 8, 32>}, {transform_indices = @transform_2, window_bounds = array<i64: 32, 32>}, {transform_indices = @transform_3, window_bounds = array<i64: 3, 32>}, {transform_indices = @transform_4, window_bounds = array<i64: 8, 32>}]} {
    %c0 = arith.constant 0 : index
    %c0_0 = arith.constant 0 : index
    %0 = vector.load %arg3[%c0, %c0_0] : memref<8x32xf32, #tpu.memory_space<vmem>>, vector<8x32xf32>
    %c0_1 = arith.constant 0 : index
    %c0_2 = arith.constant 0 : index
    %1 = vector.load %arg4[%c0_1, %c0_2] : memref<32x32xf32, #tpu.memory_space<vmem>>, vector<32x32xf32>
    %cst = arith.constant dense<0.000000e+00> : vector<8x32xf32>
    %2 = tpu.matmul %0, %1, %cst {dimension_numbers = #tpu.dot_dimension_numbers<[1], [1], [0], [0], [0, 0, 1, 0], [], []>} : vector<8x32xf32>, vector<32x32xf32>, vector<8x32xf32> -> vector<8x32xf32>
    %c0_3 = arith.constant 0 : index
    %c0_4 = arith.constant 0 : index
    %3 = vector.load %arg2[%c0_3, %c0_4] : memref<8x32xf32, #tpu.memory_space<vmem>>, vector<8x32xf32>
    %c0_5 = arith.constant 0 : index
    %c0_6 = arith.constant 0 : index
    %4 = vector.load %arg5[%c0_5, %c0_6] : memref<3x32xf32, #tpu.memory_space<vmem>>, vector<1x32xf32>
    %5 = vector.broadcast %4 : vector<1x32xf32> to vector<8x32xf32>
    %6 = arith.mulf %3, %5 : vector<8x32xf32>
    %7 = arith.subf %2, %6 : vector<8x32xf32>
    %cst_7 = arith.constant dense<0.000000e+00> : vector<32xf32>
    %8 = vector.multi_reduction <add>, %7, %cst_7 [0] : vector<8x32xf32> to vector<32xf32>
    %9 = vector.shape_cast %8 : vector<32xf32> to vector<1x32xf32>
    %cst_8 = arith.constant 1.250000e-01 : f32
    %10 = vector.broadcast %cst_8 : f32 to vector<1x32xf32>
    %11 = arith.mulf %9, %10 : vector<1x32xf32>
    %12 = vector.broadcast %11 : vector<1x32xf32> to vector<8x32xf32>
    %13 = arith.subf %7, %12 : vector<8x32xf32>
    %14 = arith.mulf %13, %13 : vector<8x32xf32>
    %cst_9 = arith.constant dense<0.000000e+00> : vector<32xf32>
    %15 = vector.multi_reduction <add>, %14, %cst_9 [0] : vector<8x32xf32> to vector<32xf32>
    %16 = vector.shape_cast %15 : vector<32xf32> to vector<1x32xf32>
    %cst_10 = arith.constant 1.250000e-01 : f32
    %17 = vector.broadcast %cst_10 : f32 to vector<1x32xf32>
    %18 = arith.mulf %16, %17 : vector<1x32xf32>
    %c1 = arith.constant 1 : index
    %c0_11 = arith.constant 0 : index
    %19 = vector.load %arg5[%c1, %c0_11] : memref<3x32xf32, #tpu.memory_space<vmem>>, vector<1x32xf32>
    %20 = vector.broadcast %19 : vector<1x32xf32> to vector<8x32xf32>
    %21 = arith.mulf %20, %13 : vector<8x32xf32>
    %cst_12 = arith.constant 9.99999974E-6 : f32
    %22 = vector.broadcast %cst_12 : f32 to vector<1x32xf32>
    %23 = arith.addf %18, %22 : vector<1x32xf32>
    %24 = math.rsqrt %23 : vector<1x32xf32>
    %25 = vector.broadcast %24 : vector<1x32xf32> to vector<8x32xf32>
    %26 = arith.mulf %21, %25 : vector<8x32xf32>
    %c2 = arith.constant 2 : index
    %c0_13 = arith.constant 0 : index
    %27 = vector.load %arg5[%c2, %c0_13] : memref<3x32xf32, #tpu.memory_space<vmem>>, vector<1x32xf32>
    %28 = vector.broadcast %27 : vector<1x32xf32> to vector<8x32xf32>
    %29 = arith.addf %26, %28 : vector<8x32xf32>
    %c0_14 = arith.constant 0 : index
    %c0_15 = arith.constant 0 : index
    %30 = vector.load %arg2[%c0_14, %c0_15] : memref<8x32xf32, #tpu.memory_space<vmem>>, vector<8x32xf32>
    %31 = arith.negf %29 : vector<8x32xf32>
    %32 = math.exp %31 : vector<8x32xf32>
    %cst_16 = arith.constant 1.000000e+00 : f32
    %33 = vector.broadcast %cst_16 : f32 to vector<8x32xf32>
    %34 = arith.addf %33, %32 : vector<8x32xf32>
    %35 = arith.divf %33, %34 : vector<8x32xf32>
    %36 = arith.mulf %30, %35 : vector<8x32xf32>
    %c0_17 = arith.constant 0 : index
    %c0_18 = arith.constant 0 : index
    %37 = vector.load %arg6[%c0_17, %c0_18] : memref<8x32xf32, #tpu.memory_space<vmem>>, vector<8x32xf32>
    tpu.vector_store %arg6[%c0_17, %c0_18], %36 {strides = array<i32>} : memref<8x32xf32, #tpu.memory_space<vmem>>, vector<8x32xf32>,
    return
  }
  func.func @transform_0(%arg0: i32, %arg1: i32) -> (i32, i32) {
    %c0_i32 = arith.constant 0 : i32
    return %arg1, %arg0 : i32, i32
  }
  func.func @transform_1(%arg0: i32, %arg1: i32) -> (i32, i32) {
    %c0_i32 = arith.constant 0 : i32
    %c0_i32_0 = arith.constant 0 : i32
    return %arg1, %c0_i32 : i32, i32
  }
  func.func @transform_2(%arg0: i32, %arg1: i32) -> (i32, i32) {
    %c0_i32 = arith.constant 0 : i32
    %c0_i32_0 = arith.constant 0 : i32
    return %arg0, %c0_i32 : i32, i32
  }
  func.func @transform_3(%arg0: i32, %arg1: i32) -> (i32, i32) {
    %c0_i32 = arith.constant 0 : i32
    %c0_i32_0 = arith.constant 0 : i32
    return %c0_i32, %arg0 : i32, i32
  }
  func.func @transform_4(%arg0: i32, %arg1: i32) -> (i32, i32) {
    %c0_i32 = arith.constant 0 : i32
    return %arg1, %arg0 : i32, i32
  }
}

module attributes {stable_mosaic.version = 11 : i64} {
  func.func @kernel(%arg0: i32, %arg1: i32, %arg2: memref<8x32xf32, #tpu.memory_space<vmem>>, %arg3: memref<8x32xf32, #tpu.memory_space<vmem>>, %arg4: memref<32x32xf32, #tpu.memory_space<vmem>>, %arg5: memref<3x32xf32, #tpu.memory_space<vmem>>, %arg6: memref<8x32xf32, #tpu.memory_space<vmem>>) attributes {dimension_semantics = [#tpu.dimension_semantics<parallel>, #tpu.dimension_semantics<arbitrary>], iteration_bounds = array<i64: 1, 1>, scalar_prefetch = 0 : i64, scratch_operands = 0 : i64, tpu.core_type = #tpu.core_type<tc>, window_params = [{transform_indices = @transform_0, window_bounds = array<i64: 8, 32>}, {transform_indices = @transform_1, window_bounds = array<i64: 8, 32>}, {transform_indices = @transform_2, window_bounds = array<i64: 32, 32>}, {transform_indices = @transform_3, window_bounds = array<i64: 3, 32>}, {transform_indices = @transform_4, window_bounds = array<i64: 8, 32>}]} {
    %c0 = arith.constant 0 : index
    %c0_0 = arith.constant 0 : index
    %0 = vector.load %arg3[%c0, %c0_0] : memref<8x32xf32, #tpu.memory_space<vmem>>, vector<8x32xf32>
    %c0_1 = arith.constant 0 : index
    %c0_2 = arith.constant 0 : index
    %1 = vector.load %arg4[%c0_1, %c0_2] : memref<32x32xf32, #tpu.memory_space<vmem>>, vector<32x32xf32>
    %cst = arith.constant dense<0.000000e+00> : vector<8x32xf32>
    %2 = tpu.matmul %0, %1, %cst {dimension_numbers = #tpu.dot_dimension_numbers<[1], [1], [0], [0], [0, 0, 1, 0], [], []>} : vector<8x32xf32>, vector<32x32xf32>, vector<8x32xf32> -> vector<8x32xf32>
    %c0_3 = arith.constant 0 : index
    %c0_4 = arith.constant 0 : index
    %3 = vector.load %arg2[%c0_3, %c0_4] : memref<8x32xf32, #tpu.memory_space<vmem>>, vector<8x32xf32>
    %c0_5 = arith.constant 0 : index
    %c0_6 = arith.constant 0 : index
    %4 = vector.load %arg5[%c0_5, %c0_6] : memref<3x32xf32, #tpu.memory_space<vmem>>, vector<1x32xf32>
    %5 = vector.broadcast %4 : vector<1x32xf32> to vector<8x32xf32>
    %6 = arith.mulf %3, %5 : vector<8x32xf32>
    %7 = arith.subf %2, %6 : vector<8x32xf32>
    %cst_7 = arith.constant dense<0.000000e+00> : vector<32xf32>
    %8 = vector.multi_reduction <add>, %7, %cst_7 [0] : vector<8x32xf32> to vector<32xf32>
    %9 = vector.shape_cast %8 : vector<32xf32> to vector<1x32xf32>
    %cst_8 = arith.constant 1.250000e-01 : f32
    %10 = vector.broadcast %cst_8 : f32 to vector<1x32xf32>
    %11 = arith.mulf %9, %10 : vector<1x32xf32>
    %12 = vector.broadcast %11 : vector<1x32xf32> to vector<8x32xf32>
    %13 = arith.subf %7, %12 : vector<8x32xf32>
    %14 = arith.mulf %13, %13 : vector<8x32xf32>
    %cst_9 = arith.constant dense<0.000000e+00> : vector<32xf32>
    %15 = vector.multi_reduction <add>, %14, %cst_9 [0] : vector<8x32xf32> to vector<32xf32>
    %16 = vector.shape_cast %15 : vector<32xf32> to vector<1x32xf32>
    %cst_10 = arith.constant 1.250000e-01 : f32
    %17 = vector.broadcast %cst_10 : f32 to vector<1x32xf32>
    %18 = arith.mulf %16, %17 : vector<1x32xf32>
    %c1 = arith.constant 1 : index
    %c0_11 = arith.constant 0 : index
    %19 = vector.load %arg5[%c1, %c0_11] : memref<3x32xf32, #tpu.memory_space<vmem>>, vector<1x32xf32>
    %20 = vector.broadcast %19 : vector<1x32xf32> to vector<8x32xf32>
    %21 = arith.mulf %20, %13 : vector<8x32xf32>
    %cst_12 = arith.constant 9.99999974E-6 : f32
    %22 = vector.broadcast %cst_12 : f32 to vector<1x32xf32>
    %23 = arith.addf %18, %22 : vector<1x32xf32>
    %24 = math.rsqrt %23 : vector<1x32xf32>
    %25 = vector.broadcast %24 : vector<1x32xf32> to vector<8x32xf32>
    %26 = arith.mulf %21, %25 : vector<8x32xf32>
    %c2 = arith.constant 2 : index
    %c0_13 = arith.constant 0 : index
    %27 = vector.load %arg5[%c2, %c0_13] : memref<3x32xf32, #tpu.memory_space<vmem>>, vector<1x32xf32>
    %28 = vector.broadcast %27 : vector<1x32xf32> to vector<8x32xf32>
    %29 = arith.addf %26, %28 : vector<8x32xf32>
    %c0_14 = arith.constant 0 : index
    %c0_15 = arith.constant 0 : index
    %30 = vector.load %arg2[%c0_14, %c0_15] : memref<8x32xf32, #tpu.memory_space<vmem>>, vector<8x32xf32>
    %31 = arith.negf %29 : vector<8x32xf32>
    %32 = math.exp %31 : vector<8x32xf32>
    %cst_16 = arith.constant 1.000000e+00 : f32
    %33 = vector.broadcast %cst_16 : f32 to vector<8x32xf32>
    %34 = arith.addf %33, %32 : vector<8x32xf32>
    %35 = arith.divf %33, %34 : vector<8x32xf32>
    %36 = arith.mulf %30, %35 : vector<8x32xf32>
    %c0_17 = arith.constant 0 : index
    %c0_18 = arith.constant 0 : index
    %37 = vector.load %arg6[%c0_17, %c0_18] : memref<8x32xf32, #tpu.memory_space<vmem>>, vector<8x32xf32>
    tpu.vector_store %arg6[%c0_17, %c0_18], %36 {strides = array<i32>} : memref<8x32xf32, #tpu.memory_space<vmem>>, vector<8x32xf32>,
    return
  }
  func.func @transform_0(%arg0: i32, %arg1: i32) -> (i32, i32) {
    %c0_i32 = arith.constant 0 : i32
    return %arg1, %arg0 : i32, i32
  }
  func.func @transform_1(%arg0: i32, %arg1: i32) -> (i32, i32) {
    %c0_i32 = arith.constant 0 : i32
    %c0_i32_0 = arith.constant 0 : i32
    return %arg1, %c0_i32 : i32, i32
  }
  func.func @transform_2(%arg0: i32, %arg1: i32) -> (i32, i32) {
    %c0_i32 = arith.constant 0 : i32
    %c0_i32_0 = arith.constant 0 : i32
    return %arg0, %c0_i32 : i32, i32
  }
  func.func @transform_3(%arg0: i32, %arg1: i32) -> (i32, i32) {
    %c0_i32 = arith.constant 0 : i32
    %c0_i32_0 = arith.constant 0 : i32
    return %c0_i32, %arg0 : i32, i32
  }
  func.func @transform_4(%arg0: i32, %arg1: i32) -> (i32, i32) {
    %c0_i32 = arith.constant 0 : i32
    return %arg1, %arg0 : i32, i32
  }
}

</mosaic_0001>

<llo_original>
// kernel: tpu_custom_call.1
$region0: #{tpu_custom_call.1}
  #allocation0 [shape = 'u32[]', space=smem, size = 0x4, offset = 0x4, fixed_abs, tag = 'smem constant byte address 0x4 - core index']
  #allocation1 [shape = 'u32[144,128]{1,0:T(1,128)}', space=vmem, size = 0x12000, scoped, tag = 'internal scratch']
  %s0 = inlined_call_operand.hbm [shape: f32[8,32], index: 0, kind: input, shape index: {}]
  %s1 = inlined_call_operand.hbm [shape: f32[8,32], index: 1, kind: input, shape index: {}]
  %s2 = inlined_call_operand.hbm [shape: f32[32,32], index: 2, kind: input, shape index: {}]
  %s3 = inlined_call_operand.vmem [shape: f32[3,32], index: 3, kind: input, shape index: {}]
  %s4 = inlined_call_operand.hbm [shape: f32[8,32], index: 4, kind: output, shape index: {}]
  %s5 = sld [smem:[#allocation0]]
  $region38: #{tpu_custom_call.1} parent=0
    _
  %s7 = ssub.s32 1, %s5
  %s8 = scalar_select 0, %s7, %s5
  $region1: #{tpu_custom_call.1} parent=0
    #allocation2 [shape = 'u8[4096]{0}', space=vmem, size = 0x1000, scoped, tag = 'input window, operand 0, single buffered']
    #allocation3 [shape = 's32[1]{0}', space=sflag, size = 0x4, scoped, tag = 'scoped memory for tpu_custom_call.1']
    #allocation4 [shape = 's32[1]{0}', space=sflag, size = 0x4, scoped, tag = 'scoped memory for tpu_custom_call.1']
    #allocation5 [shape = 'u8[4096]{0}', space=vmem, size = 0x1000, scoped, tag = 'input window, operand 1, single buffered']
    #allocation6 [shape = 's32[1]{0}', space=sflag, size = 0x4, scoped, tag = 'scoped memory for tpu_custom_call.1']
    #allocation7 [shape = 'u8[16384]{0}', space=vmem, size = 0x4000, scoped, tag = 'input window, operand 2, single buffered']
    #allocation8 [shape = 'u8[4096]{0}', space=vmem, size = 0x1000, scoped, tag = 'output window, operand 0, single buffered']
    %9 = vsyncpa [#allocation3], 0
    %10 = vsyncpa [#allocation6], 0
    %11 = vsyncpa [#allocation4], 0
    // Predicated region
    $region2: #{tpu_custom_call.1} parent=1 // pred_check
      _
    $region3: #{tpu_custom_call.1} parent=1 // pred_check_branch
      %13 = sbr.rel (0) target = $region5
    $region4: #{tpu_custom_call.1} parent=1 // pred_region
      %s15 = ssub.s32 128, 128
      %16 = vsyncadd [#allocation3], %s15
      %s18 = sshll.u32 [#allocation2], 4
      %s19 = int_to_ptr.vmem [resolvable:$true] %s18
      %21 = dma.hbm_to_vmem [thread:$0]  %s0, 128, %s19, [#allocation3]
    $region5: #{tpu_custom_call.1} parent=1 // pred_fallthru
      _
    // Predicated region
    $region6: #{tpu_custom_call.1} parent=1 // pred_check
      _
    $region7: #{tpu_custom_call.1} parent=1 // pred_check_branch
      %23 = sbr.rel (0) target = $region9
    $region8: #{tpu_custom_call.1} parent=1 // pred_region
      %s25 = ssub.s32 128, 128
      %26 = vsyncadd [#allocation6], %s25
      %s28 = sshll.u32 [#allocation5], 4
      %s29 = int_to_ptr.vmem [resolvable:$true] %s28
      %31 = dma.hbm_to_vmem [thread:$0]  %s1, 128, %s29, [#allocation6]
    $region9: #{tpu_custom_call.1} parent=1 // pred_fallthru
      _
    // Predicated region
    $region10: #{tpu_custom_call.1} parent=1 // pred_check
      _
    $region11: #{tpu_custom_call.1} parent=1 // pred_check_branch
      %33 = sbr.rel (0) target = $region13
    $region12: #{tpu_custom_call.1} parent=1 // pred_region
      %s35 = ssub.s32 512, 512
      %36 = vsyncadd [#allocation6], %s35
      %s37 = sshll.u32 [#allocation7], 4
      %s38 = int_to_ptr.vmem [resolvable:$true] %s37
      %43 = dma.hbm_to_vmem [thread:$0]  %s2, 512, %s38, [#allocation6], 128, 128, 8
    $region13: #{tpu_custom_call.1} parent=1 // pred_fallthru
      _
    // Predicated region
    $region14: #{tpu_custom_call.1} parent=1 // pred_check
      _
    $region15: #{tpu_custom_call.1} parent=1 // pred_check_branch
      %45 = sbr.rel (0) target = $region17
    $region16: #{tpu_custom_call.1} parent=1 // pred_region
      _
    $region17: #{tpu_custom_call.1} parent=1 // pred_fallthru
      _
    // Predicated region
    $region18: #{tpu_custom_call.1} parent=1 // pred_check
      _
    $region19: #{tpu_custom_call.1} parent=1 // pred_check_branch
      %47 = sbr.rel (0) target = $region21
    $region20: #{tpu_custom_call.1} parent=1 // pred_region
      %48 = dma.done [#allocation3], 128
    $region21: #{tpu_custom_call.1} parent=1 // pred_fallthru
      _
    // Predicated region
    $region22: #{tpu_custom_call.1} parent=1 // pred_check
      _
    $region23: #{tpu_custom_call.1} parent=1 // pred_check_branch
      %50 = sbr.rel (0) target = $region25
    $region24: #{tpu_custom_call.1} parent=1 // pred_region
      %51 = dma.done [#allocation6], 128
    $region25: #{tpu_custom_call.1} parent=1 // pred_fallthru
      _
    // Predicated region
    $region26: #{tpu_custom_call.1} parent=1 // pred_check
      _
    $region27: #{tpu_custom_call.1} parent=1 // pred_check_branch
      %53 = sbr.rel (0) target = $region29
    $region28: #{tpu_custom_call.1} parent=1 // pred_region
      %54 = dma.done [#allocation6], 512
    $region29: #{tpu_custom_call.1} parent=1 // pred_fallthru
      _
    %v55 = vld [vmem:[#allocation5] sm:$0xff]
    %v56 = vld [vmem:[#allocation7] sm:$0xff]
    %v57 = vld [vmem:[#allocation7 + $0x8] sm:$0xff]
    %v58 = vld [vmem:[#allocation7 + $0x10] sm:$0xff]
    %v59 = vld [vmem:[#allocation7 + $0x18] sm:$0xff]
    %vm60 = vcmask 261120
    %v62 = vsel %vm60, %v55, 0
    %v65 = vsel %vm60, %v56, 0
    %v68 = vsel %vm60, %v57, 0
    %v71 = vsel %vm60, %v58, 0
    %v74 = vsel %vm60, %v59, 0
    %76 = vmatprep.subr.mxu0 0.0
    %77 = vmatpush1.xpose.msra.mxu0 0.0
    %78 = vmatprep.subr.mxu0 0.0
    %79 = vmatpush1.xpose.msra.mxu0 0.0
    %80 = vmatprep.subr.mxu0 0.0
    %81 = vmatpush1.xpose.msra.mxu0 0.0
    %82 = vmatprep.subr.mxu0 0.0
    %83 = vmatpush1.xpose.msra.mxu0 0.0
    %84 = vmatprep.subr.mxu0 0.0
    %85 = vmatpush1.xpose.msra.mxu0 0.0
    %86 = vmatprep.subr.mxu0 0.0
    %87 = vmatpush1.xpose.msra.mxu0 0.0
    %88 = vmatprep.subr.mxu0 0.0
    %89 = vmatpush1.xpose.msra.mxu0 0.0
    %90 = vmatprep.subr.mxu0 0.0
    %91 = vmatpush1.xpose.msra.mxu0 0.0
    %92 = vmatprep.subr.mxu0 0.0
    %93 = vmatpush1.xpose.msra.mxu0 0.0
    %94 = vmatprep.subr.mxu0 0.0
    %95 = vmatpush1.xpose.msra.mxu0 0.0
    %96 = vmatprep.subr.mxu0 0.0
    %97 = vmatpush1.xpose.msra.mxu0 0.0
    %98 = vmatprep.subr.mxu0 0.0
    %99 = vmatpush1.xpose.msra.mxu0 0.0
    %100 = vmatprep.subr.mxu0 0.0
    %101 = vmatpush1.xpose.msra.mxu0 %v74
    %102 = vmatprep.subr.mxu0 0.0
    %103 = vmatpush1.xpose.msra.mxu0 %v71
    %104 = vmatprep.subr.mxu0 0.0
    %105 = vmatpush1.xpose.msra.mxu0 %v68
    %106 = vmatprep.subr.mxu0 0.0
    %107 = vmatpush1.xpose.msra.mxu0 %v65
    %108 = vmatprep.subr.mxu0 0.0
    %109 = vmatpush2.xpose.msra.mxu0 0.0
    %110 = vmatprep.subr.mxu0 0.0
    %111 = vmatpush2.xpose.msra.mxu0 0.0
    %112 = vmatprep.subr.mxu0 0.0
    %113 = vmatpush2.xpose.msra.mxu0 0.0
    %114 = vmatprep.subr.mxu0 0.0
    %115 = vmatpush2.xpose.msra.mxu0 0.0
    %116 = vmatprep.subr.mxu0 0.0
    %117 = vmatpush2.xpose.msra.mxu0 0.0
    %118 = vmatprep.subr.mxu0 0.0
    %119 = vmatpush2.xpose.msra.mxu0 0.0
    %120 = vmatprep.subr.mxu0 0.0
    %121 = vmatpush2.xpose.msra.mxu0 0.0
    %122 = vmatprep.subr.mxu0 0.0
    %123 = vmatpush2.xpose.msra.mxu0 0.0
    %124 = vmatprep.subr.mxu0 0.0
    %125 = vmatpush2.xpose.msra.mxu0 0.0
    %126 = vmatprep.subr.mxu0 0.0
    %127 = vmatpush2.xpose.msra.mxu0 0.0
    %128 = vmatprep.subr.mxu0 0.0
    %129 = vmatpush2.xpose.msra.mxu0 0.0
    %130 = vmatprep.subr.mxu0 0.0
    %131 = vmatpush2.xpose.msra.mxu0 0.0
    %132 = vmatprep.subr.mxu0 0.0
    %133 = vmatpush2.xpose.msra.mxu0 0.0
    %134 = vmatprep.subr.mxu0 0.0
    %135 = vmatpush2.xpose.msra.mxu0 0.0
    %136 = vmatprep.subr.mxu0 0.0
    %137 = vmatpush2.xpose.msra.mxu0 0.0
    %138 = vmatprep.subr.mxu0 0.0
    %139 = vmatpush2.xpose.msra.mxu0 0.0
    %140 = vmatprep.mubr.f32.mxu0 0.0
    %141 = vmatmul.mubr.f32.gmra.mxu0 %v62
    %v142 = vpop.f32.mrf.mxu0
    %v143 = vadd.f32 0.0, %v142
    %v144 = vpop.f32.mrf.mxu0
    %145 = vdwg.mxu0
    %v146 = vld [vmem:[#allocation2] sm:$0xff]
    %v147 = vld [vmem:[%s3] sm:$0x1]
    %v148 = vlaneseq
    %v149 = vshrl.u32 %v148, 7
    %v150 = vsub.s32 0, %v149
    %v151 = vrot.slane %v147, %v150
    %v152 = vmul.f32 %v146, %v151
    %v153 = vsub.f32 %v143, %v152
    %v154 = vsel %vm60, %v153, 0.0
    %v155 = vrot.slane %v154, 4
    %v156 = vadd.f32 %v154, %v155
    %v157 = vrot.slane %v156, 2
    %v158 = vadd.f32 %v156, %v157
    %v159 = vrot.slane %v158, 1
    %v160 = vadd.f32 %v158, %v159
    %v161 = vmul.f32 %v160, 0.125
    %v162 = vsub.f32 %v153, %v161
    %v163 = vmul.f32 %v162, %v162
    %v164 = vsel %vm60, %v163, 0.0
    %v165 = vrot.slane %v164, 4
    %v166 = vadd.f32 %v164, %v165
    %v167 = vrot.slane %v166, 2
    %v168 = vadd.f32 %v166, %v167
    %v169 = vrot.slane %v168, 1
    %v170 = vadd.f32 %v168, %v169
    %v171 = vmul.f32 %v170, 0.125
    %v172 = vld [vmem:[%s3 + $0x1] sm:$0x1]
    %v173 = vlaneseq
    %v174 = vshrl.u32 %v173, 7
    %v175 = vsub.s32 0, %v174
    %v176 = vrot.slane %v172, %v175
    %v177 = vmul.f32 %v176, %v162
    %v178 = vadd.f32 %v171, 1e-05
    %v179 = vrsqrt.pop %v178
    %v180 = vmul.f32 %v177, %v179
    %v181 = vld [vmem:[%s3 + $0x2] sm:$0x1]
    %v182 = vlaneseq
    %v183 = vshrl.u32 %v182, 7
    %v184 = vsub.s32 0, %v183
    %v185 = vrot.slane %v181, %v184
    %v186 = vadd.f32 %v180, %v185
    %v187 = vxor.u32 %v186, 2147483648
    %v188 = vmul.f32 %v187, 1.442695
    %v189 = vpow.pop %v188
    %v190 = vadd.f32 %v189, 1.0
    %v191 = vrcp.pop %v190
    %v192 = vmul.f32 1.0, %v191
    %v193 = vmul.f32 %v146, %v192
    %194 = vst.msk [vmem:[#allocation8] sm:$0xff] %vm60, %v193
    // Predicated region
    $region30: #{tpu_custom_call.1} parent=1 // pred_check
      _
    $region31: #{tpu_custom_call.1} parent=1 // pred_check_branch
      %196 = sbr.rel (0) target = $region33
    $region32: #{tpu_custom_call.1} parent=1 // pred_region
      %s198 = ssub.s32 128, 128
      %199 = vsyncadd [#allocation4], %s198
      %s201 = sshll.u32 [#allocation8], 4
      %s202 = int_to_ptr.vmem [resolvable:$true] %s201
      %204 = dma.vmem_to_hbm [thread:$0]  %s202, 128, %s4, [#allocation4]
    $region33: #{tpu_custom_call.1} parent=1 // pred_fallthru
      _
    // Predicated region
    $region34: #{tpu_custom_call.1} parent=1 // pred_check
      _
    $region35: #{tpu_custom_call.1} parent=1 // pred_check_branch
      %206 = sbr.rel (0) target = $region37
    $region36: #{tpu_custom_call.1} parent=1 // pred_region
      %207 = dma.done [#allocation4], 128
    $region37: #{tpu_custom_call.1} parent=1 // pred_fallthru
      _
    %208 = vsyncpa [#allocation3], 1
    %209 = vsyncpa [#allocation6], 1
    %210 = vsyncpa [#allocation4], 1

// kernel: tpu_custom_call.1
$region0: #{tpu_custom_call.1}
  #allocation0 [shape = 'u32[]', space=smem, size = 0x4, offset = 0x4, fixed_abs, tag = 'smem constant byte address 0x4 - core index']
  #allocation1 [shape = 'u32[144,128]{1,0:T(1,128)}', space=vmem, size = 0x12000, scoped, tag = 'internal scratch']
  %s0 = inlined_call_operand.hbm [shape: f32[8,32], index: 0, kind: input, shape index: {}]
  %s1 = inlined_call_operand.hbm [shape: f32[8,32], index: 1, kind: input, shape index: {}]
  %s2 = inlined_call_operand.hbm [shape: f32[32,32], index: 2, kind: input, shape index: {}]
  %s3 = inlined_call_operand.vmem [shape: f32[3,32], index: 3, kind: input, shape index: {}]
  %s4 = inlined_call_operand.hbm [shape: f32[8,32], index: 4, kind: output, shape index: {}]
  %s5 = sld [smem:[#allocation0]]
  $region38: #{tpu_custom_call.1} parent=0
    _
  %s7 = ssub.s32 1, %s5
  %s8 = scalar_select 0, %s7, %s5
  $region1: #{tpu_custom_call.1} parent=0
    #allocation2 [shape = 'u8[4096]{0}', space=vmem, size = 0x1000, scoped, tag = 'input window, operand 0, single buffered']
    #allocation3 [shape = 's32[1]{0}', space=sflag, size = 0x4, scoped, tag = 'scoped memory for tpu_custom_call.1']
    #allocation4 [shape = 's32[1]{0}', space=sflag, size = 0x4, scoped, tag = 'scoped memory for tpu_custom_call.1']
    #allocation5 [shape = 'u8[4096]{0}', space=vmem, size = 0x1000, scoped, tag = 'input window, operand 1, single buffered']
    #allocation6 [shape = 's32[1]{0}', space=sflag, size = 0x4, scoped, tag = 'scoped memory for tpu_custom_call.1']
    #allocation7 [shape = 'u8[16384]{0}', space=vmem, size = 0x4000, scoped, tag = 'input window, operand 2, single buffered']
    #allocation8 [shape = 'u8[4096]{0}', space=vmem, size = 0x1000, scoped, tag = 'output window, operand 0, single buffered']
    %9 = vsyncpa [#allocation3], 0
    %10 = vsyncpa [#allocation6], 0
    %11 = vsyncpa [#allocation4], 0
    // Predicated region
    $region2: #{tpu_custom_call.1} parent=1 // pred_check
      _
    $region3: #{tpu_custom_call.1} parent=1 // pred_check_branch
      %13 = sbr.rel (0) target = $region5
    $region4: #{tpu_custom_call.1} parent=1 // pred_region
      %s15 = ssub.s32 128, 128
      %16 = vsyncadd [#allocation3], %s15
      %s18 = sshll.u32 [#allocation2], 4
      %s19 = int_to_ptr.vmem [resolvable:$true] %s18
      %21 = dma.hbm_to_vmem [thread:$0]  %s0, 128, %s19, [#allocation3]
    $region5: #{tpu_custom_call.1} parent=1 // pred_fallthru
      _
    // Predicated region
    $region6: #{tpu_custom_call.1} parent=1 // pred_check
      _
    $region7: #{tpu_custom_call.1} parent=1 // pred_check_branch
      %23 = sbr.rel (0) target = $region9
    $region8: #{tpu_custom_call.1} parent=1 // pred_region
      %s25 = ssub.s32 128, 128
      %26 = vsyncadd [#allocation6], %s25
      %s28 = sshll.u32 [#allocation5], 4
      %s29 = int_to_ptr.vmem [resolvable:$true] %s28
      %31 = dma.hbm_to_vmem [thread:$0]  %s1, 128, %s29, [#allocation6]
    $region9: #{tpu_custom_call.1} parent=1 // pred_fallthru
      _
    // Predicated region
    $region10: #{tpu_custom_call.1} parent=1 // pred_check
      _
    $region11: #{tpu_custom_call.1} parent=1 // pred_check_branch
      %33 = sbr.rel (0) target = $region13
    $region12: #{tpu_custom_call.1} parent=1 // pred_region
      %s35 = ssub.s32 512, 512
      %36 = vsyncadd [#allocation6], %s35
      %s37 = sshll.u32 [#allocation7], 4
      %s38 = int_to_ptr.vmem [resolvable:$true] %s37
      %43 = dma.hbm_to_vmem [thread:$0]  %s2, 512, %s38, [#allocation6], 128, 128, 8
    $region13: #{tpu_custom_call.1} parent=1 // pred_fallthru
      _
    // Predicated region
    $region14: #{tpu_custom_call.1} parent=1 // pred_check
      _
    $region15: #{tpu_custom_call.1} parent=1 // pred_check_branch
      %45 = sbr.rel (0) target = $region17
    $region16: #{tpu_custom_call.1} parent=1 // pred_region
      _
    $region17: #{tpu_custom_call.1} parent=1 // pred_fallthru
      _
    // Predicated region
    $region18: #{tpu_custom_call.1} parent=1 // pred_check
      _
    $region19: #{tpu_custom_call.1} parent=1 // pred_check_branch
      %47 = sbr.rel (0) target = $region21
    $region20: #{tpu_custom_call.1} parent=1 // pred_region
      %48 = dma.done [#allocation3], 128
    $region21: #{tpu_custom_call.1} parent=1 // pred_fallthru
      _
    // Predicated region
    $region22: #{tpu_custom_call.1} parent=1 // pred_check
      _
    $region23: #{tpu_custom_call.1} parent=1 // pred_check_branch
      %50 = sbr.rel (0) target = $region25
    $region24: #{tpu_custom_call.1} parent=1 // pred_region
      %51 = dma.done [#allocation6], 128
    $region25: #{tpu_custom_call.1} parent=1 // pred_fallthru
      _
    // Predicated region
    $region26: #{tpu_custom_call.1} parent=1 // pred_check
      _
    $region27: #{tpu_custom_call.1} parent=1 // pred_check_branch
      %53 = sbr.rel (0) target = $region29
    $region28: #{tpu_custom_call.1} parent=1 // pred_region
      %54 = dma.done [#allocation6], 512
    $region29: #{tpu_custom_call.1} parent=1 // pred_fallthru
      _
    %v55 = vld [vmem:[#allocation5] sm:$0xff]
    %v56 = vld [vmem:[#allocation7] sm:$0xff]
    %v57 = vld [vmem:[#allocation7 + $0x8] sm:$0xff]
    %v58 = vld [vmem:[#allocation7 + $0x10] sm:$0xff]
    %v59 = vld [vmem:[#allocation7 + $0x18] sm:$0xff]
    %vm60 = vcmask 261120
    %v62 = vsel %vm60, %v55, 0
    %v65 = vsel %vm60, %v56, 0
    %v68 = vsel %vm60, %v57, 0
    %v71 = vsel %vm60, %v58, 0
    %v74 = vsel %vm60, %v59, 0
    %76 = vmatprep.subr.mxu0 0.0
    %77 = vmatpush1.xpose.msra.mxu0 0.0
    %78 = vmatprep.subr.mxu0 0.0
    %79 = vmatpush1.xpose.msra.mxu0 0.0
    %80 = vmatprep.subr.mxu0 0.0
    %81 = vmatpush1.xpose.msra.mxu0 0.0
    %82 = vmatprep.subr.mxu0 0.0
    %83 = vmatpush1.xpose.msra.mxu0 0.0
    %84 = vmatprep.subr.mxu0 0.0
    %85 = vmatpush1.xpose.msra.mxu0 0.0
    %86 = vmatprep.subr.mxu0 0.0
    %87 = vmatpush1.xpose.msra.mxu0 0.0
    %88 = vmatprep.subr.mxu0 0.0
    %89 = vmatpush1.xpose.msra.mxu0 0.0
    %90 = vmatprep.subr.mxu0 0.0
    %91 = vmatpush1.xpose.msra.mxu0 0.0
    %92 = vmatprep.subr.mxu0 0.0
    %93 = vmatpush1.xpose.msra.mxu0 0.0
    %94 = vmatprep.subr.mxu0 0.0
    %95 = vmatpush1.xpose.msra.mxu0 0.0
    %96 = vmatprep.subr.mxu0 0.0
    %97 = vmatpush1.xpose.msra.mxu0 0.0
    %98 = vmatprep.subr.mxu0 0.0
    %99 = vmatpush1.xpose.msra.mxu0 0.0
    %100 = vmatprep.subr.mxu0 0.0
    %101 = vmatpush1.xpose.msra.mxu0 %v74
    %102 = vmatprep.subr.mxu0 0.0
    %103 = vmatpush1.xpose.msra.mxu0 %v71
    %104 = vmatprep.subr.mxu0 0.0
    %105 = vmatpush1.xpose.msra.mxu0 %v68
    %106 = vmatprep.subr.mxu0 0.0
    %107 = vmatpush1.xpose.msra.mxu0 %v65
    %108 = vmatprep.subr.mxu0 0.0
    %109 = vmatpush2.xpose.msra.mxu0 0.0
    %110 = vmatprep.subr.mxu0 0.0
    %111 = vmatpush2.xpose.msra.mxu0 0.0
    %112 = vmatprep.subr.mxu0 0.0
    %113 = vmatpush2.xpose.msra.mxu0 0.0
    %114 = vmatprep.subr.mxu0 0.0
    %115 = vmatpush2.xpose.msra.mxu0 0.0
    %116 = vmatprep.subr.mxu0 0.0
    %117 = vmatpush2.xpose.msra.mxu0 0.0
    %118 = vmatprep.subr.mxu0 0.0
    %119 = vmatpush2.xpose.msra.mxu0 0.0
    %120 = vmatprep.subr.mxu0 0.0
    %121 = vmatpush2.xpose.msra.mxu0 0.0
    %122 = vmatprep.subr.mxu0 0.0
    %123 = vmatpush2.xpose.msra.mxu0 0.0
    %124 = vmatprep.subr.mxu0 0.0
    %125 = vmatpush2.xpose.msra.mxu0 0.0
    %126 = vmatprep.subr.mxu0 0.0
    %127 = vmatpush2.xpose.msra.mxu0 0.0
    %128 = vmatprep.subr.mxu0 0.0
    %129 = vmatpush2.xpose.msra.mxu0 0.0
    %130 = vmatprep.subr.mxu0 0.0
    %131 = vmatpush2.xpose.msra.mxu0 0.0
    %132 = vmatprep.subr.mxu0 0.0
    %133 = vmatpush2.xpose.msra.mxu0 0.0
    %134 = vmatprep.subr.mxu0 0.0
    %135 = vmatpush2.xpose.msra.mxu0 0.0
    %136 = vmatprep.subr.mxu0 0.0
    %137 = vmatpush2.xpose.msra.mxu0 0.0
    %138 = vmatprep.subr.mxu0 0.0
    %139 = vmatpush2.xpose.msra.mxu0 0.0
    %140 = vmatprep.mubr.f32.mxu0 0.0
    %141 = vmatmul.mubr.f32.gmra.mxu0 %v62
    %v142 = vpop.f32.mrf.mxu0
    %v143 = vadd.f32 0.0, %v142
    %v144 = vpop.f32.mrf.mxu0
    %145 = vdwg.mxu0
    %v146 = vld [vmem:[#allocation2] sm:$0xff]
    %v147 = vld [vmem:[%s3] sm:$0x1]
    %v148 = vlaneseq
    %v149 = vshrl.u32 %v148, 7
    %v150 = vsub.s32 0, %v149
    %v151 = vrot.slane %v147, %v150
    %v152 = vmul.f32 %v146, %v151
    %v153 = vsub.f32 %v143, %v152
    %v154 = vsel %vm60, %v153, 0.0
    %v155 = vrot.slane %v154, 4
    %v156 = vadd.f32 %v154, %v155
    %v157 = vrot.slane %v156, 2
    %v158 = vadd.f32 %v156, %v157
    %v159 = vrot.slane %v158, 1
    %v160 = vadd.f32 %v158, %v159
    %v161 = vmul.f32 %v160, 0.125
    %v162 = vsub.f32 %v153, %v161
    %v163 = vmul.f32 %v162, %v162
    %v164 = vsel %vm60, %v163, 0.0
    %v165 = vrot.slane %v164, 4
    %v166 = vadd.f32 %v164, %v165
    %v167 = vrot.slane %v166, 2
    %v168 = vadd.f32 %v166, %v167
    %v169 = vrot.slane %v168, 1
    %v170 = vadd.f32 %v168, %v169
    %v171 = vmul.f32 %v170, 0.125
    %v172 = vld [vmem:[%s3 + $0x1] sm:$0x1]
    %v173 = vlaneseq
    %v174 = vshrl.u32 %v173, 7
    %v175 = vsub.s32 0, %v174
    %v176 = vrot.slane %v172, %v175
    %v177 = vmul.f32 %v176, %v162
    %v178 = vadd.f32 %v171, 1e-05
    %v179 = vrsqrt.pop %v178
    %v180 = vmul.f32 %v177, %v179
    %v181 = vld [vmem:[%s3 + $0x2] sm:$0x1]
    %v182 = vlaneseq
    %v183 = vshrl.u32 %v182, 7
    %v184 = vsub.s32 0, %v183
    %v185 = vrot.slane %v181, %v184
    %v186 = vadd.f32 %v180, %v185
    %v187 = vxor.u32 %v186, 2147483648
    %v188 = vmul.f32 %v187, 1.442695
    %v189 = vpow.pop %v188
    %v190 = vadd.f32 %v189, 1.0
    %v191 = vrcp.pop %v190
    %v192 = vmul.f32 1.0, %v191
    %v193 = vmul.f32 %v146, %v192
    %194 = vst.msk [vmem:[#allocation8] sm:$0xff] %vm60, %v193
    // Predicated region
    $region30: #{tpu_custom_call.1} parent=1 // pred_check
      _
    $region31: #{tpu_custom_call.1} parent=1 // pred_check_branch
      %196 = sbr.rel (0) target = $region33
    $region32: #{tpu_custom_call.1} parent=1 // pred_region
      %s198 = ssub.s32 128, 128
      %199 = vsyncadd [#allocation4], %s198
      %s201 = sshll.u32 [#allocation8], 4
      %s202 = int_to_ptr.vmem [resolvable:$true] %s201
      %204 = dma.vmem_to_hbm [thread:$0]  %s202, 128, %s4, [#allocation4]
    $region33: #{tpu_custom_call.1} parent=1 // pred_fallthru
      _
    // Predicated region
    $region34: #{tpu_custom_call.1} parent=1 // pred_check
      _
    $region35: #{tpu_custom_call.1} parent=1 // pred_check_branch
      %206 = sbr.rel (0) target = $region37
    $region36: #{tpu_custom_call.1} parent=1 // pred_region
      %207 = dma.done [#allocation4], 128
    $region37: #{tpu_custom_call.1} parent=1 // pred_fallthru
      _
    %208 = vsyncpa [#allocation3], 1
    %209 = vsyncpa [#allocation6], 1
    %210 = vsyncpa [#allocation4], 1

</llo_original>
